<compile_context>
chip_gen: v7x
topology: tpu7x:2x2x1
jax: 0.10.0
libtpu: 0.0.40
codegen_flags: <defaults>
</compile_context>

<pallas_src>
import functools

import jax
import jax.numpy as jnp
from jax.experimental import pallas as pl
from jax.experimental.pallas import tpu as pltpu

_LANE = 128
_SUBLANE = 8


def _round_up(n, m):
    return ((n + m - 1) // m) * m


def _ffnn_kernel(x_ref, w1_ref, b1_ref, w2_ref, b2_ref, out_ref, good_ref):
    # Layer 1: bf16 operands on the MXU, f32 accumulation, f32 epilogue.
    x = x_ref[...].astype(jnp.bfloat16)
    h = jnp.dot(x, w1_ref[...], preferred_element_type=jnp.float32)
    h = jnp.maximum(h + b1_ref[...], 0.0)
    # Layer 2.
    o = jnp.dot(h.astype(jnp.bfloat16), w2_ref[...],
                preferred_element_type=jnp.float32)
    o = jnp.maximum(o + b2_ref[...], 0.0)
    out_ref[...] = o.astype(out_ref.dtype)
    # Fused goodness: cross-lane reduce rides the XLU slot; padded output
    # columns are exactly zero so they do not perturb the sum.
    good_ref[...] = jnp.sum(o * o, axis=-1, keepdims=True)


def prepare_params(w1, b1, w2, b2):
    """One-time parameter preprocessing (hoisted out of the hot path).

    Takes PyTorch nn.Linear-layout params:
      w1: (H, K), b1: (H,), w2: (O, H), b2: (O,)
    Returns bf16 transposed+padded weights and f32 padded biases, plus (H, O).
    """
    H, K = w1.shape
    O = w2.shape[0]
    Hp = _round_up(H, _LANE)
    Op = _round_up(O, _LANE)

    w1_t = jnp.zeros((K, Hp), jnp.bfloat16)
    w1_t = w1_t.at[:, :H].set(jnp.asarray(w1, jnp.float32).T.astype(jnp.bfloat16))
    b1_r = jnp.zeros((1, Hp), jnp.float32)
    b1_r = b1_r.at[:, :H].set(jnp.asarray(b1, jnp.float32).reshape(1, -1))

    w2_t = jnp.zeros((Hp, Op), jnp.bfloat16)
    w2_t = w2_t.at[:H, :O].set(jnp.asarray(w2, jnp.float32).T.astype(jnp.bfloat16))
    b2_r = jnp.zeros((1, Op), jnp.float32)
    b2_r = b2_r.at[:, :O].set(jnp.asarray(b2, jnp.float32).reshape(1, -1))

    return (w1_t, b1_r, w2_t, b2_r), (H, O)


@functools.partial(jax.jit, static_argnames=("out_size", "return_goodness"))
def forward_forward_nn(x, params, *, out_size, return_goodness=False):
    """Fused forward pass of the two-layer ReLU MLP (+ optional goodness)."""
    w1_t, b1_r, w2_t, b2_r = params
    B, K = x.shape
    Hp = w1_t.shape[1]
    Op = w2_t.shape[1]

    # Batch tile: multiple of 8 sublanes, up to 128 rows per grid step.
    TB = min(_LANE, _round_up(B, _SUBLANE))
    B_pad = _round_up(B, TB)

    x_f = jnp.asarray(x, jnp.float32)
    if B_pad != B:
        x_f = jnp.pad(x_f, ((0, B_pad - B), (0, 0)))

    grid = (B_pad // TB,)

    # Advisory cost estimate for XLA scheduling around the custom call.
    flops = 2 * B_pad * (K * Hp + Hp * Op)
    bytes_accessed = (x_f.size * 4 + w1_t.size * 2 + w2_t.size * 2
                      + b1_r.size * 4 + b2_r.size * 4
                      + B_pad * Op * 4 + B_pad * 4)
    cost = pl.CostEstimate(flops=flops, transcendentals=0,
                           bytes_accessed=bytes_accessed)

    # VMEM budget: double-buffered x/out/good tiles + resident weights/biases
    # + f32 intermediates; clamp to [32 MiB, 64 MiB] (v7x physical is 64 MiB).
    step_bytes = TB * K * 4 + TB * Op * 4 + TB * 4
    resident = w1_t.size * 2 + w2_t.size * 2 + (b1_r.size + b2_r.size) * 4
    working = TB * Hp * 4 + TB * Op * 4
    vmem_bytes = 2 * step_bytes + resident + working + (2 << 20)
    vmem_limit = int(min(max(vmem_bytes, 32 << 20), 64 << 20))

    out_pad, good_pad = pl.pallas_call(
        _ffnn_kernel,
        out_shape=(
            jax.ShapeDtypeStruct((B_pad, Op), jnp.float32),
            jax.ShapeDtypeStruct((B_pad, 1), jnp.float32),
        ),
        grid_spec=pltpu.PrefetchScalarGridSpec(
            num_scalar_prefetch=0,
            grid=grid,
            in_specs=[
                pl.BlockSpec((TB, K), lambda i: (i, 0)),   # x: tiled over batch
                pl.BlockSpec((K, Hp), lambda i: (0, 0)),   # W1: VMEM-resident
                pl.BlockSpec((1, Hp), lambda i: (0, 0)),   # b1
                pl.BlockSpec((Hp, Op), lambda i: (0, 0)),  # W2: VMEM-resident
                pl.BlockSpec((1, Op), lambda i: (0, 0)),   # b2
            ],
            out_specs=[
                pl.BlockSpec((TB, Op), lambda i: (i, 0)),  # activations
                pl.BlockSpec((TB, 1), lambda i: (i, 0)),   # goodness
            ],
        ),
        compiler_params=pltpu.CompilerParams(
            dimension_semantics=("parallel",),
            vmem_limit_bytes=vmem_limit,
        ),
        cost_estimate=cost,
    )(x_f, w1_t, b1_r, w2_t, b2_r)

    out = out_pad[:B, :out_size]
    if return_goodness:
        return out, good_pad[:B, 0]
    return out


def goodness(x):
    # Standalone equivalent of ForwardForwardNN.goodness; prefer the fused
    # in-kernel output (return_goodness=True) to avoid re-reading activations.
    return jnp.sum(x ** 2, axis=1)


# TODO(synk): training-side logic (optimizer / FF positive-negative passes) is
# not part of Module.forward and is intentionally not implemented here.


if __name__ == "__main__":
    batch, input_size, hidden_size, output_size = 8, 16, 32, 8

    key = jax.random.PRNGKey(0)
    kx, kw1, kb1, kw2, kb2 = jax.random.split(key, 5)

    x = jax.random.normal(kx, (batch, input_size), dtype=jnp.float32)
    w1 = jax.random.uniform(kw1, (hidden_size, input_size), jnp.float32, -0.1, 0.1)
    b1 = jax.random.uniform(kb1, (hidden_size,), jnp.float32, -0.1, 0.1)
    w2 = jax.random.uniform(kw2, (output_size, hidden_size), jnp.float32, -0.1, 0.1)
    b2 = jax.random.uniform(kb2, (output_size,), jnp.float32, -0.1, 0.1)

    # One-time parameter preprocessing (transpose + pad + bf16 cast).
    params, (_, out_size) = prepare_params(w1, b1, w2, b2)

    out, good = forward_forward_nn(x, params, out_size=out_size,
                                   return_goodness=True)
    out = jax.block_until_ready(out)
    good = jax.block_until_ready(good)

    # f32 reference; tolerance loosened for bf16 MXU operands.
    h_ref = jnp.maximum(x @ w1.T + b1, 0.0)
    o_ref = jnp.maximum(h_ref @ w2.T + b2, 0.0)
    g_ref = jnp.sum(o_ref ** 2, axis=1)

    assert out.shape == (batch, output_size)
    assert good.shape == (batch,)
    assert jnp.allclose(out, o_ref, atol=1e-2, rtol=1e-2)
    assert jnp.allclose(good, g_ref, atol=1e-2, rtol=1e-2)

    print("KERNEL_OK")
</pallas_src>

<mosaic_0001>
module attributes {stable_mosaic.version = 11 : i64} {
  func.func @_ffnn_kernel(%arg0: i32, %arg1: memref<8x16xf32, #tpu.memory_space<vmem>>, %arg2: memref<16x128xbf16, #tpu.memory_space<vmem>>, %arg3: memref<1x128xf32, #tpu.memory_space<vmem>>, %arg4: memref<128x128xbf16, #tpu.memory_space<vmem>>, %arg5: memref<1x128xf32, #tpu.memory_space<vmem>>, %arg6: memref<8x128xf32, #tpu.memory_space<vmem>>, %arg7: memref<8x1xf32, #tpu.memory_space<vmem>>) attributes {dimension_semantics = [#tpu.dimension_semantics<parallel>], iteration_bounds = array<i64: 1>, scalar_prefetch = 0 : i64, scratch_operands = 0 : i64, tpu.core_type = #tpu.core_type<tc>, window_params = [{transform_indices = @transform_0, window_bounds = array<i64: 8, 16>}, {pipeline_mode = #tpu.pipeline_mode<synchronous>, transform_indices = @transform_1, window_bounds = array<i64: 16, 128>}, {pipeline_mode = #tpu.pipeline_mode<synchronous>, transform_indices = @transform_2, window_bounds = array<i64: 1, 128>}, {pipeline_mode = #tpu.pipeline_mode<synchronous>, transform_indices = @transform_3, window_bounds = array<i64: 128, 128>}, {pipeline_mode = #tpu.pipeline_mode<synchronous>, transform_indices = @transform_4, window_bounds = array<i64: 1, 128>}, {transform_indices = @transform_5, window_bounds = array<i64: 8, 128>}, {transform_indices = @transform_6, window_bounds = array<i64: 8, 1>}]} {
    %c0 = arith.constant 0 : index
    %c0_0 = arith.constant 0 : index
    %0 = vector.load %arg1[%c0, %c0_0] : memref<8x16xf32, #tpu.memory_space<vmem>>, vector<8x16xf32>
    %1 = arith.truncf %0 : vector<8x16xf32> to vector<8x16xbf16>
    %c0_1 = arith.constant 0 : index
    %c0_2 = arith.constant 0 : index
    %2 = vector.load %arg2[%c0_1, %c0_2] : memref<16x128xbf16, #tpu.memory_space<vmem>>, vector<16x128xbf16>
    %cst = arith.constant dense<0.000000e+00> : vector<8x128xf32>
    %3 = tpu.matmul %1, %2, %cst {dimension_numbers = #tpu.dot_dimension_numbers<[1], [0], [0], [1], [0, 0, 1, 1], [], []>} : vector<8x16xbf16>, vector<16x128xbf16>, vector<8x128xf32> -> vector<8x128xf32>
    %c0_3 = arith.constant 0 : index
    %c0_4 = arith.constant 0 : index
    %4 = vector.load %arg3[%c0_3, %c0_4] : memref<1x128xf32, #tpu.memory_space<vmem>>, vector<1x128xf32>
    %5 = vector.broadcast %4 : vector<1x128xf32> to vector<8x128xf32>
    %6 = arith.addf %3, %5 : vector<8x128xf32>
    %cst_5 = arith.constant 0.000000e+00 : f32
    %7 = vector.broadcast %cst_5 : f32 to vector<8x128xf32>
    %8 = arith.maximumf %6, %7 : vector<8x128xf32>
    %9 = arith.truncf %8 : vector<8x128xf32> to vector<8x128xbf16>
    %c0_6 = arith.constant 0 : index
    %c0_7 = arith.constant 0 : index
    %10 = vector.load %arg4[%c0_6, %c0_7] : memref<128x128xbf16, #tpu.memory_space<vmem>>, vector<128x128xbf16>
    %cst_8 = arith.constant dense<0.000000e+00> : vector<8x128xf32>
    %11 = tpu.matmul %9, %10, %cst_8 {dimension_numbers = #tpu.dot_dimension_numbers<[1], [0], [0], [1], [0, 0, 1, 1], [], []>} : vector<8x128xbf16>, vector<128x128xbf16>, vector<8x128xf32> -> vector<8x128xf32>
    %c0_9 = arith.constant 0 : index
    %c0_10 = arith.constant 0 : index
    %12 = vector.load %arg5[%c0_9, %c0_10] : memref<1x128xf32, #tpu.memory_space<vmem>>, vector<1x128xf32>
    %13 = vector.broadcast %12 : vector<1x128xf32> to vector<8x128xf32>
    %14 = arith.addf %11, %13 : vector<8x128xf32>
    %cst_11 = arith.constant 0.000000e+00 : f32
    %15 = vector.broadcast %cst_11 : f32 to vector<8x128xf32>
    %16 = arith.maximumf %14, %15 : vector<8x128xf32>
    %c0_12 = arith.constant 0 : index
    %c0_13 = arith.constant 0 : index
    %17 = vector.load %arg6[%c0_12, %c0_13] : memref<8x128xf32, #tpu.memory_space<vmem>>, vector<8x128xf32>
    tpu.vector_store %arg6[%c0_12, %c0_13], %16 {strides = array<i32>} : memref<8x128xf32, #tpu.memory_space<vmem>>, vector<8x128xf32>,
    %18 = arith.mulf %16, %16 : vector<8x128xf32>
    %cst_14 = arith.constant dense<0.000000e+00> : vector<8xf32>
    %19 = vector.multi_reduction <add>, %18, %cst_14 [1] : vector<8x128xf32> to vector<8xf32>
    %20 = vector.shape_cast %19 : vector<8xf32> to vector<8x1xf32>
    %c0_15 = arith.constant 0 : index
    %c0_16 = arith.constant 0 : index
    %21 = vector.load %arg7[%c0_15, %c0_16] : memref<8x1xf32, #tpu.memory_space<vmem>>, vector<8x1xf32>
    tpu.vector_store %arg7[%c0_15, %c0_16], %20 {strides = array<i32>} : memref<8x1xf32, #tpu.memory_space<vmem>>, vector<8x1xf32>,
    return
  }
  func.func @transform_0(%arg0: i32) -> (i32, i32) {
    %c0_i32 = arith.constant 0 : i32
    %c0_i32_0 = arith.constant 0 : i32
    return %arg0, %c0_i32 : i32, i32
  }
  func.func @transform_1(%arg0: i32) -> (i32, i32) {
    %c0_i32 = arith.constant 0 : i32
    %c0_i32_0 = arith.constant 0 : i32
    %c0_i32_1 = arith.constant 0 : i32
    return %c0_i32, %c0_i32_0 : i32, i32
  }
  func.func @transform_2(%arg0: i32) -> (i32, i32) {
    %c0_i32 = arith.constant 0 : i32
    %c0_i32_0 = arith.constant 0 : i32
    %c0_i32_1 = arith.constant 0 : i32
    return %c0_i32, %c0_i32_0 : i32, i32
  }
  func.func @transform_3(%arg0: i32) -> (i32, i32) {
    %c0_i32 = arith.constant 0 : i32
    %c0_i32_0 = arith.constant 0 : i32
    %c0_i32_1 = arith.constant 0 : i32
    return %c0_i32, %c0_i32_0 : i32, i32
  }
  func.func @transform_4(%arg0: i32) -> (i32, i32) {
    %c0_i32 = arith.constant 0 : i32
    %c0_i32_0 = arith.constant 0 : i32
    %c0_i32_1 = arith.constant 0 : i32
    return %c0_i32, %c0_i32_0 : i32, i32
  }
  func.func @transform_5(%arg0: i32) -> (i32, i32) {
    %c0_i32 = arith.constant 0 : i32
    %c0_i32_0 = arith.constant 0 : i32
    return %arg0, %c0_i32 : i32, i32
  }
  func.func @transform_6(%arg0: i32) -> (i32, i32) {
    %c0_i32 = arith.constant 0 : i32
    %c0_i32_0 = arith.constant 0 : i32
    return %arg0, %c0_i32 : i32, i32
  }
}

</mosaic_0001>

<llo_original>
// kernel: forward_forward_nn.1
$region0: #{forward_forward_nn.1}
  #allocation0 [shape = 'u32[]', space=smem, size = 0x4, offset = 0x4, fixed_abs, tag = 'smem constant byte address 0x4 - core index']
  #allocation1 [shape = 'u32[144,128]{1,0:T(1,128)}', space=vmem, size = 0x12000, scoped, tag = 'internal scratch']
  %s0 = inlined_call_operand.hbm [shape: f32[8,16], index: 0, kind: input, shape index: {}]
  %s1 = inlined_call_operand.hbm [shape: bf16[16,128], index: 1, kind: input, shape index: {}]
  %s2 = inlined_call_operand.vmem [shape: f32[1,128], index: 2, kind: input, shape index: {}]
  %s3 = inlined_call_operand.hbm [shape: bf16[128,128], index: 3, kind: input, shape index: {}]
  %s4 = inlined_call_operand.vmem [shape: f32[1,128], index: 4, kind: input, shape index: {}]
  %s5 = inlined_call_operand.hbm [shape: f32[8,128], index: 5, kind: output, shape index: {0}]
  %s6 = inlined_call_operand.vmem [shape: f32[8,1], index: 6, kind: output, shape index: {1}]
  %7 = xla_tuple %s5, %s6
  %s8 = sld [smem:[#allocation0]]
  $region50: #{forward_forward_nn.1} parent=0
    _
  %s10 = ssub.s32 1, %s8
  %s11 = scalar_select 0, %s10, %s8
  $region1: #{forward_forward_nn.1} parent=0
    #allocation2 [shape = 'u8[4096]{0}', space=vmem, size = 0x1000, scoped, tag = 'input window, operand 0, single buffered']
    #allocation3 [shape = 's32[1]{0}', space=sflag, size = 0x4, scoped, tag = 'scoped memory for forward_forward_nn.1']
    #allocation4 [shape = 's32[1]{0}', space=sflag, size = 0x4, scoped, tag = 'scoped memory for forward_forward_nn.1']
    #allocation5 [shape = 'u8[4096]{0}', space=vmem, size = 0x1000, scoped, tag = 'input window, operand 1, single buffered']
    #allocation6 [shape = 's32[1]{0}', space=sflag, size = 0x4, scoped, tag = 'scoped memory for forward_forward_nn.1']
    #allocation7 [shape = 'u8[32768]{0}', space=vmem, size = 0x8000, scoped, tag = 'input window, operand 3, single buffered']
    #allocation8 [shape = 'u8[4096]{0}', space=vmem, size = 0x1000, scoped, tag = 'output window, operand 0, single buffered']
    %12 = vsyncpa [#allocation3], 0
    %13 = vsyncpa [#allocation6], 0
    %14 = vsyncpa [#allocation4], 0
    // Predicated region
    $region2: #{forward_forward_nn.1} parent=1 // pred_check
      _
    $region3: #{forward_forward_nn.1} parent=1 // pred_check_branch
      %16 = sbr.rel (0) target = $region5
    $region4: #{forward_forward_nn.1} parent=1 // pred_region
      %s18 = ssub.s32 128, 128
      %19 = vsyncadd [#allocation3], %s18
      %s21 = sshll.u32 [#allocation2], 4
      %s22 = int_to_ptr.vmem [resolvable:$true] %s21
      %24 = dma.hbm_to_vmem [thread:$0]  %s0, 128, %s22, [#allocation3]
    $region5: #{forward_forward_nn.1} parent=1 // pred_fallthru
      _
    // Predicated region
    $region6: #{forward_forward_nn.1} parent=1 // pred_check
      _
    $region7: #{forward_forward_nn.1} parent=1 // pred_check_branch
      %26 = sbr.rel (0) target = $region9
    $region8: #{forward_forward_nn.1} parent=1 // pred_region
      %s28 = ssub.s32 128, 128
      %29 = vsyncadd [#allocation6], %s28
      %s30 = sshll.u32 [#allocation5], 4
      %s31 = int_to_ptr.vmem [resolvable:$true] %s30
      %36 = dma.hbm_to_vmem [thread:$0]  %s1, 128, %s31, [#allocation6], 64, 64, 4
    $region9: #{forward_forward_nn.1} parent=1 // pred_fallthru
      _
    // Predicated region
    $region10: #{forward_forward_nn.1} parent=1 // pred_check
      _
    $region11: #{forward_forward_nn.1} parent=1 // pred_check_branch
      %38 = sbr.rel (0) target = $region13
    $region12: #{forward_forward_nn.1} parent=1 // pred_region
      _
    $region13: #{forward_forward_nn.1} parent=1 // pred_fallthru
      _
    // Predicated region
    $region14: #{forward_forward_nn.1} parent=1 // pred_check
      _
    $region15: #{forward_forward_nn.1} parent=1 // pred_check_branch
      %40 = sbr.rel (0) target = $region17
    $region16: #{forward_forward_nn.1} parent=1 // pred_region
      %s42 = ssub.s32 1024, 1024
      %43 = vsyncadd [#allocation6], %s42
      %s44 = sshll.u32 [#allocation7], 4
      %s45 = int_to_ptr.vmem [resolvable:$true] %s44
      %50 = dma.hbm_to_vmem [thread:$0]  %s3, 1024, %s45, [#allocation6], 64, 64, 4
    $region17: #{forward_forward_nn.1} parent=1 // pred_fallthru
      _
    // Predicated region
    $region18: #{forward_forward_nn.1} parent=1 // pred_check
      _
    $region19: #{forward_forward_nn.1} parent=1 // pred_check_branch
      %52 = sbr.rel (0) target = $region21
    $region20: #{forward_forward_nn.1} parent=1 // pred_region
      _
    $region21: #{forward_forward_nn.1} parent=1 // pred_fallthru
      _
    // Predicated region
    $region22: #{forward_forward_nn.1} parent=1 // pred_check
      _
    $region23: #{forward_forward_nn.1} parent=1 // pred_check_branch
      %54 = sbr.rel (0) target = $region25
    $region24: #{forward_forward_nn.1} parent=1 // pred_region
      %55 = dma.done [#allocation3], 128
    $region25: #{forward_forward_nn.1} parent=1 // pred_fallthru
      _
    // Predicated region
    $region26: #{forward_forward_nn.1} parent=1 // pred_check
      _
    $region27: #{forward_forward_nn.1} parent=1 // pred_check_branch
      %57 = sbr.rel (0) target = $region29
    $region28: #{forward_forward_nn.1} parent=1 // pred_region
      %58 = dma.done [#allocation6], 128
    $region29: #{forward_forward_nn.1} parent=1 // pred_fallthru
      _
    // Predicated region
    $region30: #{forward_forward_nn.1} parent=1 // pred_check
      _
    $region31: #{forward_forward_nn.1} parent=1 // pred_check_branch
      %60 = sbr.rel (0) target = $region33
    $region32: #{forward_forward_nn.1} parent=1 // pred_region
      %61 = dma.done [#allocation6], 1024
    $region33: #{forward_forward_nn.1} parent=1 // pred_fallthru
      _
    %v63 = vld [vmem:[#allocation2] sm:$0xff]
    %v64 = vpack.c.bf16 %v63, %v63
    %v65 = vld [vmem:[#allocation5] sm:$0xf]
    %v66 = vld [vmem:[#allocation5 + $0x4] sm:$0xf]
    %v67 = vld [vmem:[%s2] sm:$0x1]
    %v69 = vlaneseq
    %v70 = vshrl.u32 %v69, 7
    %v71 = vsub.s32 0, %v70
    %v72 = vrot.slane %v67, %v71
    %v76 = vunpack.c.l.b16 %v65
    %v77 = vunpack.c.l.b16 %v66
    %v78 = vpack.c.b16 %v77, %v76
    %vm80 = vcmask 130048
    %v82 = vsel %vm80, %v64, 0
    %84 = vmatprep.subr.bf16.mxu0 0
    %85 = vmatpush1.bf16.msra.mxu0 %v78
    %86 = vmatprep.subr.bf16.mxu0 0
    %87 = vmatpush1.bf16.msra.mxu0 0
    %88 = vmatprep.subr.bf16.mxu0 0
    %89 = vmatpush1.bf16.msra.mxu0 0
    %90 = vmatprep.subr.bf16.mxu0 0
    %91 = vmatpush1.bf16.msra.mxu0 0
    %92 = vmatprep.subr.bf16.mxu0 0
    %93 = vmatpush1.bf16.msra.mxu0 0
    %94 = vmatprep.subr.bf16.mxu0 0
    %95 = vmatpush1.bf16.msra.mxu0 0
    %96 = vmatprep.subr.bf16.mxu0 0
    %97 = vmatpush1.bf16.msra.mxu0 0
    %98 = vmatprep.subr.bf16.mxu0 0
    %99 = vmatpush1.bf16.msra.mxu0 0
    %100 = vmatprep.subr.bf16.mxu0 0
    %101 = vmatpush1.bf16.msra.mxu0 0
    %102 = vmatprep.subr.bf16.mxu0 0
    %103 = vmatpush1.bf16.msra.mxu0 0
    %104 = vmatprep.subr.bf16.mxu0 0
    %105 = vmatpush1.bf16.msra.mxu0 0
    %106 = vmatprep.subr.bf16.mxu0 0
    %107 = vmatpush1.bf16.msra.mxu0 0
    %108 = vmatprep.subr.bf16.mxu0 0
    %109 = vmatpush1.bf16.msra.mxu0 0
    %110 = vmatprep.subr.bf16.mxu0 0
    %111 = vmatpush1.bf16.msra.mxu0 0
    %112 = vmatprep.subr.bf16.mxu0 0
    %113 = vmatpush1.bf16.msra.mxu0 0
    %114 = vmatprep.subr.bf16.mxu0 0
    %115 = vmatpush1.bf16.msra.mxu0 0
    %116 = vmatprep.mubr.bf16.mxu0 0
    %117 = vmatmul.mubr.bf16.gmra.mrb[0].mxu0 %v82
    %v118 = vpop.f32.mrb[0].mxu0
    %v119 = vadd.f32 %v72, %v118
    %v120 = vpop.f32.mrb[0].mxu0
    %v121 = vpop.f32.mrb[0].mxu0
    %v122 = vpop.f32.mrb[0].mxu0
    %123 = vdwg.mxu0
    %v124 = vmax.f32 %v119, 0.0
    %v125 = vpack.c.bf16 %v124, %v124
    %v126 = vld [vmem:[#allocation7] sm:$0xf]
    %v127 = vld [vmem:[#allocation7 + $0x4] sm:$0xf]
    %v128 = vld [vmem:[#allocation7 + $0x8] sm:$0xf]
    %v129 = vld [vmem:[#allocation7 + $0xc] sm:$0xf]
    %v130 = vld [vmem:[#allocation7 + $0x10] sm:$0xf]
    %v131 = vld [vmem:[#allocation7 + $0x14] sm:$0xf]
    %v132 = vld [vmem:[#allocation7 + $0x18] sm:$0xf]
    %v133 = vld [vmem:[#allocation7 + $0x1c] sm:$0xf]
    %v134 = vld [vmem:[#allocation7 + $0x20] sm:$0xf]
    %v135 = vld [vmem:[#allocation7 + $0x24] sm:$0xf]
    %v136 = vld [vmem:[#allocation7 + $0x28] sm:$0xf]
    %v137 = vld [vmem:[#allocation7 + $0x2c] sm:$0xf]
    %v138 = vld [vmem:[#allocation7 + $0x30] sm:$0xf]
    %v139 = vld [vmem:[#allocation7 + $0x34] sm:$0xf]
    %v140 = vld [vmem:[#allocation7 + $0x38] sm:$0xf]
    %v141 = vld [vmem:[#allocation7 + $0x3c] sm:$0xf]
    %v142 = vld [vmem:[%s4] sm:$0x1]
    %v144 = vlaneseq
    %v145 = vshrl.u32 %v144, 7
    %v146 = vsub.s32 0, %v145
    %v147 = vrot.slane %v142, %v146
    %v165 = vunpack.c.l.b16 %v126
    %v166 = vunpack.c.l.b16 %v127
    %v167 = vunpack.c.l.b16 %v128
    %v168 = vunpack.c.l.b16 %v129
    %v169 = vunpack.c.l.b16 %v130
    %v170 = vunpack.c.l.b16 %v131
    %v171 = vunpack.c.l.b16 %v132
    %v172 = vunpack.c.l.b16 %v133
    %v173 = vunpack.c.l.b16 %v134
    %v174 = vunpack.c.l.b16 %v135
    %v175 = vunpack.c.l.b16 %v136
    %v176 = vunpack.c.l.b16 %v137
    %v177 = vunpack.c.l.b16 %v138
    %v178 = vunpack.c.l.b16 %v139
    %v179 = vunpack.c.l.b16 %v140
    %v180 = vunpack.c.l.b16 %v141
    %v181 = vpack.c.b16 %v166, %v165
    %v182 = vpack.c.b16 %v168, %v167
    %v183 = vpack.c.b16 %v170, %v169
    %v184 = vpack.c.b16 %v172, %v171
    %v185 = vpack.c.b16 %v174, %v173
    %v186 = vpack.c.b16 %v176, %v175
    %v187 = vpack.c.b16 %v178, %v177
    %v188 = vpack.c.b16 %v180, %v179
    %197 = vmatprep.subr.bf16.mxu0 0
    %198 = vmatpush1.bf16.msra.mxu0 %v181
    %199 = vmatprep.subr.bf16.mxu0 0
    %200 = vmatpush1.bf16.msra.mxu0 %v182
    %201 = vmatprep.subr.bf16.mxu0 0
    %202 = vmatpush1.bf16.msra.mxu0 %v183
    %203 = vmatprep.subr.bf16.mxu0 0
    %204 = vmatpush1.bf16.msra.mxu0 %v184
    %205 = vmatprep.subr.bf16.mxu0 0
    %206 = vmatpush1.bf16.msra.mxu0 %v185
    %207 = vmatprep.subr.bf16.mxu0 0
    %208 = vmatpush1.bf16.msra.mxu0 %v186
    %209 = vmatprep.subr.bf16.mxu0 0
    %210 = vmatpush1.bf16.msra.mxu0 %v187
    %211 = vmatprep.subr.bf16.mxu0 0
    %212 = vmatpush1.bf16.msra.mxu0 %v188
    %213 = vmatprep.subr.bf16.mxu0 0
    %214 = vmatpush1.bf16.msra.mxu0 0
    %215 = vmatprep.subr.bf16.mxu0 0
    %216 = vmatpush1.bf16.msra.mxu0 0
    %217 = vmatprep.subr.bf16.mxu0 0
    %218 = vmatpush1.bf16.msra.mxu0 0
    %219 = vmatprep.subr.bf16.mxu0 0
    %220 = vmatpush1.bf16.msra.mxu0 0
    %221 = vmatprep.subr.bf16.mxu0 0
    %222 = vmatpush1.bf16.msra.mxu0 0
    %223 = vmatprep.subr.bf16.mxu0 0
    %224 = vmatpush1.bf16.msra.mxu0 0
    %225 = vmatprep.subr.bf16.mxu0 0
    %226 = vmatpush1.bf16.msra.mxu0 0
    %227 = vmatprep.subr.bf16.mxu0 0
    %228 = vmatpush1.bf16.msra.mxu0 0
    %229 = vmatprep.mubr.bf16.mxu0 0
    %230 = vmatmul.mubr.bf16.gmra.mrb[0].mxu0 %v125
    %v231 = vpop.f32.mrb[0].mxu0
    %v232 = vadd.f32 %v147, %v231
    %v233 = vpop.f32.mrb[0].mxu0
    %v234 = vpop.f32.mrb[0].mxu0
    %v235 = vpop.f32.mrb[0].mxu0
    %236 = vdwg.mxu0
    %v237 = vmax.f32 %v232, 0.0
    %238 = vst [vmem:[#allocation8] sm:$0xff] %v237
    %v239 = vmul.f32 %v237, %v237
    %240 = vadd.xlane.f32.xlu0 %v239
    %v241 = vpop.xlane.xlu0 %240
    %vm242 = vcmask 7168
    %243 = vst.msk [vmem:[%s6] sm:$0xff] %vm242, %v241
    // Predicated region
    $region34: #{forward_forward_nn.1} parent=1 // pred_check
      _
    $region35: #{forward_forward_nn.1} parent=1 // pred_check_branch
      %245 = sbr.rel (0) target = $region37
    $region36: #{forward_forward_nn.1} parent=1 // pred_region
      %s247 = ssub.s32 128, 128
      %248 = vsyncadd [#allocation4], %s247
      %s250 = sshll.u32 [#allocation8], 4
      %s251 = int_to_ptr.vmem [resolvable:$true] %s250
      %253 = dma.vmem_to_hbm [thread:$0]  %s251, 128, %s5, [#allocation4]
    $region37: #{forward_forward_nn.1} parent=1 // pred_fallthru
      _
    // Predicated region
    $region38: #{forward_forward_nn.1} parent=1 // pred_check
      _
    $region39: #{forward_forward_nn.1} parent=1 // pred_check_branch
      %255 = sbr.rel (0) target = $region41
    $region40: #{forward_forward_nn.1} parent=1 // pred_region
      _
    $region41: #{forward_forward_nn.1} parent=1 // pred_fallthru
      _
    // Predicated region
    $region42: #{forward_forward_nn.1} parent=1 // pred_check
      _
    $region43: #{forward_forward_nn.1} parent=1 // pred_check_branch
      %257 = sbr.rel (0) target = $region45
    $region44: #{forward_forward_nn.1} parent=1 // pred_region
      %258 = dma.done [#allocation4], 128
    $region45: #{forward_forward_nn.1} parent=1 // pred_fallthru
      _
    // Predicated region
    $region46: #{forward_forward_nn.1} parent=1 // pred_check
      _
    $region47: #{forward_forward_nn.1} parent=1 // pred_check_branch
      %260 = sbr.rel (0) target = $region49
    $region48: #{forward_forward_nn.1} parent=1 // pred_region
      _
    $region49: #{forward_forward_nn.1} parent=1 // pred_fallthru
      _
    %261 = vsyncpa [#allocation3], 1
    %262 = vsyncpa [#allocation6], 1
    %263 = vsyncpa [#allocation4], 1

</llo_original>
